<compile_context>
chip_gen: v6e
topology: v6e:2x2x1
jax: 0.10.0
libtpu: 0.0.40
codegen_flags: <defaults>
</compile_context>

<pallas_src>
import functools
import math

import jax
import jax.numpy as jnp
from jax.experimental import pallas as pl
from jax.experimental.pallas import tpu as pltpu


def _round_up(n: int, m: int) -> int:
    return ((n + m - 1) // m) * m


def _cwg_kernel(x_ref, w_ref, b_ref, o_ref, *, apply_crelu: bool):
    # x_ref: (tb, C, ts)   w_ref: (C, ts)   b_ref: (1, ts)   o_ref: (tb, ts)
    channels = x_ref.shape[1]
    acc = jnp.zeros(o_ref.shape, jnp.float32)
    # Short unrolled per-channel MAC; only the (tb, ts) f32 accumulator stays live.
    for c in range(channels):
        x_c = x_ref[:, c, :].astype(jnp.float32)           # (tb, ts), sublane-dense
        w_c = w_ref[pl.ds(c, 1), :].astype(jnp.float32)    # (1, ts), broadcasts
        acc = acc + x_c * w_c
    y = acc + b_ref[...].astype(jnp.float32)
    if apply_crelu:
        # CappedReLU; NaN compares are False -> 0, same as the torch.where reference.
        y = jnp.where((y > 0.0) & (y <= 1.0), y, jnp.zeros_like(y))
    o_ref[...] = y.astype(o_ref.dtype)


def _choose_tiles(B: int, C: int, S: int, itemsize: int):
    """Pick (tb, ts) targeting ~4 MiB of real x data per grid step."""
    target = 4 << 20
    per_sample = C * S * itemsize

    if B * per_sample <= target:
        # Whole problem fits in one block budget: full-S lane tiles, weights resident.
        # Split the batch into two multiple-of-8 halves only when it is big enough
        # (helps a 2-TensorCore v7x part; a forced split is pure loss on v5e/v6e).
        if B >= 16:
            return _round_up(pl.cdiv(B, 2), 8), S
        return B, S

    # Prefer full-S lane tiles with tb a multiple of 8 (contiguous per-sample DMA,
    # weights fetched exactly once per size tile with batch innermost).
    tb = (target // per_sample) // 8 * 8
    if tb >= 8:
        return tb, S

    # S is large: small batch tile, lane-dense tiles along the size axis.
    tb = B if B < 8 else 8
    ts = max(128, (target // (tb * C * itemsize)) // 128 * 128)
    if ts >= S:
        ts = S
    return tb, ts


def cwg_forward(x: jax.Array, weights: jax.Array, bias: jax.Array,
                *, node_activation: bool = False) -> jax.Array:
    """CWG forward: x (B, C, S), weights (C, S), bias (S,) -> (B, S)."""
    B, C, S = x.shape
    assert weights.shape == (C, S), (weights.shape, (C, S))
    assert bias.shape == (S,), (bias.shape, (S,))
    itemsize = jnp.dtype(x.dtype).itemsize

    tb, ts = _choose_tiles(B, C, S, itemsize)
    ns, nb = pl.cdiv(S, ts), pl.cdiv(B, tb)
    bias2d = bias.reshape(1, S)  # metadata-only reshape; lane-dense last dim

    # Explicit VMEM budget: account for (sublane, 128) tile padding (the channel
    # axis C pads to the sublane pack of the dtype) and double buffering.
    sub = max(8, (8 * 4) // itemsize)          # 8 (f32), 16 (bf16), 32 (int8)
    p_c, p_ts = _round_up(C, sub), _round_up(ts, 128)
    x_blk = tb * p_c * p_ts * itemsize
    w_blk = p_c * p_ts * itemsize
    b_blk = sub * p_ts * itemsize
    o_blk = _round_up(tb, sub) * p_ts * itemsize
    vmem_need = 2 * (x_blk + w_blk + b_blk + o_blk)
    vmem_limit = int(min(max(2 * vmem_need, 32 << 20), 64 << 20))

    kernel = functools.partial(_cwg_kernel, apply_crelu=node_activation)

    return pl.pallas_call(
        kernel,
        out_shape=jax.ShapeDtypeStruct((B, S), x.dtype),
        # Batch is the innermost (fastest) grid axis -> weights/bias block index only
        # changes when the size tile changes, so Pallas skips re-DMA of them.
        grid=(ns, nb),
        in_specs=[
            pl.BlockSpec((tb, C, ts), lambda s, b: (b, 0, s)),   # x
            pl.BlockSpec((C, ts), lambda s, b: (0, s)),          # weights
            pl.BlockSpec((1, ts), lambda s, b: (0, s)),          # bias
        ],
        out_specs=pl.BlockSpec((tb, ts), lambda s, b: (b, s)),
        compiler_params=pltpu.CompilerParams(
            dimension_semantics=("parallel", "parallel"),
            vmem_limit_bytes=vmem_limit,
        ),
        cost_estimate=pl.CostEstimate(
            flops=2 * B * C * S,
            transcendentals=0,
            bytes_accessed=(B * C * S + C * S + S + B * S) * itemsize,
        ),
    )(x, weights, bias2d)


if __name__ == "__main__":
    key = jax.random.PRNGKey(0)
    batch, channels, size = 2, 4, 256
    k1, k2 = jax.random.split(key, 2)

    # Inputs scaled so some outputs land in (0, 1], some above 1, some negative
    # (exercises both branches of the capped ReLU).
    x = jax.random.normal(k1, (batch, channels, size), dtype=jnp.float32) * 4.0
    limit = math.sqrt(6.0 / (channels + size))  # xavier_uniform, like the reference init
    weights = jax.random.uniform(k2, (channels, size), jnp.float32, -limit, limit)
    bias = jnp.zeros((size,), jnp.float32)      # nn.init.zeros_ in the reference

    for node_activation in (False, True):
        y = cwg_forward(x, weights, bias, node_activation=node_activation)
        jax.block_until_ready(y)

        ref = jnp.einsum("bcs,cs->bs", x, weights) + bias
        if node_activation:
            ref = jnp.where((ref > 0) & (ref <= 1), ref, jnp.zeros_like(ref))

        assert y.shape == ref.shape and y.dtype == x.dtype
        assert jnp.allclose(y, ref, atol=1e-5, rtol=1e-5), (
            f"mismatch vs reference (node_activation={node_activation})"
        )

    print("KERNEL_OK")
</pallas_src>

<mosaic_0001>
module attributes {stable_mosaic.version = 11 : i64} {
  func.func @_cwg_kernel(%arg0: i32, %arg1: i32, %arg2: memref<2x4x256xf32, #tpu.memory_space<vmem>>, %arg3: memref<4x256xf32, #tpu.memory_space<vmem>>, %arg4: memref<1x256xf32, #tpu.memory_space<vmem>>, %arg5: memref<2x256xf32, #tpu.memory_space<vmem>>) attributes {dimension_semantics = [#tpu.dimension_semantics<parallel>, #tpu.dimension_semantics<parallel>], iteration_bounds = array<i64: 1, 1>, scalar_prefetch = 0 : i64, scratch_operands = 0 : i64, tpu.core_type = #tpu.core_type<tc>, window_params = [{transform_indices = @transform_0, window_bounds = array<i64: 2, 4, 256>}, {transform_indices = @transform_1, window_bounds = array<i64: 4, 256>}, {transform_indices = @transform_2, window_bounds = array<i64: 1, 256>}, {transform_indices = @transform_3, window_bounds = array<i64: 2, 256>}]} {
    %cst = arith.constant 0.000000e+00 : f32
    %0 = vector.broadcast %cst : f32 to vector<2x256xf32>
    %c0 = arith.constant 0 : index
    %c0_0 = arith.constant 0 : index
    %c0_1 = arith.constant 0 : index
    %1 = vector.load %arg2[%c0, %c0_0, %c0_1] : memref<2x4x256xf32, #tpu.memory_space<vmem>>, vector<2x1x256xf32>
    %2 = vector.shape_cast %1 : vector<2x1x256xf32> to vector<2x256xf32>
    %c0_2 = arith.constant 0 : index
    %c0_3 = arith.constant 0 : index
    %3 = vector.load %arg3[%c0_2, %c0_3] : memref<4x256xf32, #tpu.memory_space<vmem>>, vector<1x256xf32>
    %4 = vector.broadcast %3 : vector<1x256xf32> to vector<2x256xf32>
    %5 = arith.mulf %2, %4 : vector<2x256xf32>
    %6 = arith.addf %0, %5 : vector<2x256xf32>
    %c0_4 = arith.constant 0 : index
    %c1 = arith.constant 1 : index
    %c0_5 = arith.constant 0 : index
    %7 = vector.load %arg2[%c0_4, %c1, %c0_5] : memref<2x4x256xf32, #tpu.memory_space<vmem>>, vector<2x1x256xf32>
    %8 = vector.shape_cast %7 : vector<2x1x256xf32> to vector<2x256xf32>
    %c1_6 = arith.constant 1 : index
    %c0_7 = arith.constant 0 : index
    %9 = vector.load %arg3[%c1_6, %c0_7] : memref<4x256xf32, #tpu.memory_space<vmem>>, vector<1x256xf32>
    %10 = vector.broadcast %9 : vector<1x256xf32> to vector<2x256xf32>
    %11 = arith.mulf %8, %10 : vector<2x256xf32>
    %12 = arith.addf %6, %11 : vector<2x256xf32>
    %c0_8 = arith.constant 0 : index
    %c2 = arith.constant 2 : index
    %c0_9 = arith.constant 0 : index
    %13 = vector.load %arg2[%c0_8, %c2, %c0_9] : memref<2x4x256xf32, #tpu.memory_space<vmem>>, vector<2x1x256xf32>
    %14 = vector.shape_cast %13 : vector<2x1x256xf32> to vector<2x256xf32>
    %c2_10 = arith.constant 2 : index
    %c0_11 = arith.constant 0 : index
    %15 = vector.load %arg3[%c2_10, %c0_11] : memref<4x256xf32, #tpu.memory_space<vmem>>, vector<1x256xf32>
    %16 = vector.broadcast %15 : vector<1x256xf32> to vector<2x256xf32>
    %17 = arith.mulf %14, %16 : vector<2x256xf32>
    %18 = arith.addf %12, %17 : vector<2x256xf32>
    %c0_12 = arith.constant 0 : index
    %c3 = arith.constant 3 : index
    %c0_13 = arith.constant 0 : index
    %19 = vector.load %arg2[%c0_12, %c3, %c0_13] : memref<2x4x256xf32, #tpu.memory_space<vmem>>, vector<2x1x256xf32>
    %20 = vector.shape_cast %19 : vector<2x1x256xf32> to vector<2x256xf32>
    %c3_14 = arith.constant 3 : index
    %c0_15 = arith.constant 0 : index
    %21 = vector.load %arg3[%c3_14, %c0_15] : memref<4x256xf32, #tpu.memory_space<vmem>>, vector<1x256xf32>
    %22 = vector.broadcast %21 : vector<1x256xf32> to vector<2x256xf32>
    %23 = arith.mulf %20, %22 : vector<2x256xf32>
    %24 = arith.addf %18, %23 : vector<2x256xf32>
    %c0_16 = arith.constant 0 : index
    %c0_17 = arith.constant 0 : index
    %25 = vector.load %arg4[%c0_16, %c0_17] : memref<1x256xf32, #tpu.memory_space<vmem>>, vector<1x256xf32>
    %26 = vector.broadcast %25 : vector<1x256xf32> to vector<2x256xf32>
    %27 = arith.addf %24, %26 : vector<2x256xf32>
    %c0_18 = arith.constant 0 : index
    %c0_19 = arith.constant 0 : index
    %28 = vector.load %arg5[%c0_18, %c0_19] : memref<2x256xf32, #tpu.memory_space<vmem>>, vector<2x256xf32>
    tpu.vector_store %arg5[%c0_18, %c0_19], %27 {strides = array<i32>} : memref<2x256xf32, #tpu.memory_space<vmem>>, vector<2x256xf32>,
    return
  }
  func.func @transform_0(%arg0: i32, %arg1: i32) -> (i32, i32, i32) {
    %c0_i32 = arith.constant 0 : i32
    %c0_i32_0 = arith.constant 0 : i32
    return %arg1, %c0_i32, %arg0 : i32, i32, i32
  }
  func.func @transform_1(%arg0: i32, %arg1: i32) -> (i32, i32) {
    %c0_i32 = arith.constant 0 : i32
    %c0_i32_0 = arith.constant 0 : i32
    return %c0_i32, %arg0 : i32, i32
  }
  func.func @transform_2(%arg0: i32, %arg1: i32) -> (i32, i32) {
    %c0_i32 = arith.constant 0 : i32
    %c0_i32_0 = arith.constant 0 : i32
    return %c0_i32, %arg0 : i32, i32
  }
  func.func @transform_3(%arg0: i32, %arg1: i32) -> (i32, i32) {
    %c0_i32 = arith.constant 0 : i32
    return %arg1, %arg0 : i32, i32
  }
}

</mosaic_0001>

<llo_original>
// kernel: tpu_custom_call.1
$region0: #{tpu_custom_call.1}
  #allocation0 [shape = 'u32[]', space=smem, size = 0x4, offset = 0x4, fixed_abs, tag = 'smem constant byte address 0x4 - core index']
  #allocation1 [shape = 'u32[144,128]{1,0:T(1,128)}', space=vmem, size = 0x12000, scoped, tag = 'internal scratch']
  %s0 = inlined_call_operand.hbm [shape: f32[2,4,256], index: 0, kind: input, shape index: {}]
  %s1 = inlined_call_operand.hbm [shape: f32[4,256], index: 1, kind: input, shape index: {}]
  %s2 = inlined_call_operand.vmem [shape: f32[1,256], index: 2, kind: input, shape index: {}]
  %s3 = inlined_call_operand.hbm [shape: f32[2,256], index: 3, kind: output, shape index: {}]
  %s4 = sld [smem:[#allocation0]]
  $region30: #{tpu_custom_call.1} parent=0
    _
  %s6 = ssub.s32 1, %s4
  %s7 = scalar_select 0, %s6, %s4
  $region1: #{tpu_custom_call.1} parent=0
    #allocation2 [shape = 'u8[8192]{0}', space=vmem, size = 0x2000, scoped, tag = 'input window, operand 0, single buffered']
    #allocation3 [shape = 's32[1]{0}', space=sflag, size = 0x4, scoped, tag = 'scoped memory for tpu_custom_call.1']
    #allocation4 [shape = 's32[1]{0}', space=sflag, size = 0x4, scoped, tag = 'scoped memory for tpu_custom_call.1']
    #allocation5 [shape = 'u8[4096]{0}', space=vmem, size = 0x1000, scoped, tag = 'input window, operand 1, single buffered']
    #allocation6 [shape = 's32[1]{0}', space=sflag, size = 0x4, scoped, tag = 'scoped memory for tpu_custom_call.1']
    #allocation7 [shape = 'u8[2048]{0}', space=vmem, size = 0x800, scoped, tag = 'output window, operand 0, single buffered']
    %8 = vsyncpa [#allocation3], 0
    %9 = vsyncpa [#allocation6], 0
    %10 = vsyncpa [#allocation4], 0
    // Predicated region
    $region2: #{tpu_custom_call.1} parent=1 // pred_check
      _
    $region3: #{tpu_custom_call.1} parent=1 // pred_check_branch
      %12 = sbr.rel (0) target = $region5
    $region4: #{tpu_custom_call.1} parent=1 // pred_region
      %s14 = ssub.s32 256, 256
      %15 = vsyncadd [#allocation3], %s14
      %s16 = sshll.u32 [#allocation2], 4
      %s17 = int_to_ptr.vmem [resolvable:$true] %s16
      %22 = dma.hbm_to_vmem [thread:$0]  %s0, 256, %s17, [#allocation3], 128, 128, 8
    $region5: #{tpu_custom_call.1} parent=1 // pred_fallthru
      _
    // Predicated region
    $region6: #{tpu_custom_call.1} parent=1 // pred_check
      _
    $region7: #{tpu_custom_call.1} parent=1 // pred_check_branch
      %24 = sbr.rel (0) target = $region9
    $region8: #{tpu_custom_call.1} parent=1 // pred_region
      %s26 = ssub.s32 128, 128
      %27 = vsyncadd [#allocation6], %s26
      %s29 = sshll.u32 [#allocation5], 4
      %s30 = int_to_ptr.vmem [resolvable:$true] %s29
      %32 = dma.hbm_to_vmem [thread:$0]  %s1, 128, %s30, [#allocation6]
    $region9: #{tpu_custom_call.1} parent=1 // pred_fallthru
      _
    // Predicated region
    $region10: #{tpu_custom_call.1} parent=1 // pred_check
      _
    $region11: #{tpu_custom_call.1} parent=1 // pred_check_branch
      %34 = sbr.rel (0) target = $region13
    $region12: #{tpu_custom_call.1} parent=1 // pred_region
      _
    $region13: #{tpu_custom_call.1} parent=1 // pred_fallthru
      _
    // Predicated region
    $region14: #{tpu_custom_call.1} parent=1 // pred_check
      _
    $region15: #{tpu_custom_call.1} parent=1 // pred_check_branch
      %36 = sbr.rel (0) target = $region17
    $region16: #{tpu_custom_call.1} parent=1 // pred_region
      %37 = dma.done [#allocation3], 256
    $region17: #{tpu_custom_call.1} parent=1 // pred_fallthru
      _
    // Predicated region
    $region18: #{tpu_custom_call.1} parent=1 // pred_check
      _
    $region19: #{tpu_custom_call.1} parent=1 // pred_check_branch
      %39 = sbr.rel (0) target = $region21
    $region20: #{tpu_custom_call.1} parent=1 // pred_region
      %40 = dma.done [#allocation6], 128
    $region21: #{tpu_custom_call.1} parent=1 // pred_fallthru
      _
    %v41 = vld [vmem:[#allocation2] ss:$4 sm:$0x3]
    %s42 = scalar_lea.vmem [#allocation2], 8
    %v43 = vld [vmem:[%s42] ss:$4 sm:$0x3]
    %v44 = vld [vmem:[#allocation5] ss:$4 sm:$0x3]
    %v46 = vlaneseq
    %v47 = vshrl.u32 %v46, 7
    %v48 = vsub.s32 0, %v47
    %v49 = vrot.slane %v44, %v48
    %v50 = vlaneseq
    %v51 = vshrl.u32 %v50, 7
    %v52 = vsub.s32 1, %v51
    %v53 = vrot.slane %v44, %v52
    %v54 = vcombine.low %v49, %v53
    %v56 = vunpack.c.l.s4 1966171168
    %v57 = vunpack.c.0.s8 %v56
    %v58 = vlaneseq
    %v59 = vshrl.u32 %v58, 7
    %v60 = vsub.s32 %v57, %v59
    %v61 = vrot.slane %v54, %v60
    %v62 = vcombine.high %v61, %v61
    %v64 = vunpack.c.l.s4 1966171168
    %v65 = vunpack.c.0.s8 %v64
    %v66 = vlaneseq
    %v67 = vshrl.u32 %v66, 7
    %v68 = vsub.s32 %v65, %v67
    %v69 = vrot.slane %v61, %v68
    %v71 = vunpack.c.l.s4 1966171168
    %v72 = vunpack.c.0.s8 %v71
    %v73 = vlaneseq
    %v74 = vshrl.u32 %v73, 7
    %v75 = vsub.s32 %v72, %v74
    %v76 = vrot.slane %v62, %v75
    %v79 = vmul.f32 %v41, %v69
    %v80 = vmul.f32 %v43, %v76
    %v81 = vadd.f32 %v79, 0.0
    %v82 = vadd.f32 %v80, 0.0
    %s83 = scalar_lea.vmem [#allocation2], 1
    %v84 = vld [vmem:[%s83] ss:$4 sm:$0x3]
    %s85 = scalar_lea.vmem [#allocation2], 9
    %v86 = vld [vmem:[%s85] ss:$4 sm:$0x3]
    %s87 = scalar_lea.vmem [#allocation5], 1
    %v88 = vld [vmem:[%s87] ss:$4 sm:$0x3]
    %v90 = vlaneseq
    %v91 = vshrl.u32 %v90, 7
    %v92 = vsub.s32 0, %v91
    %v93 = vrot.slane %v88, %v92
    %v94 = vlaneseq
    %v95 = vshrl.u32 %v94, 7
    %v96 = vsub.s32 1, %v95
    %v97 = vrot.slane %v88, %v96
    %v98 = vcombine.low %v93, %v97
    %v100 = vunpack.c.l.s4 1966171168
    %v101 = vunpack.c.0.s8 %v100
    %v102 = vlaneseq
    %v103 = vshrl.u32 %v102, 7
    %v104 = vsub.s32 %v101, %v103
    %v105 = vrot.slane %v98, %v104
    %v106 = vcombine.high %v105, %v105
    %v108 = vunpack.c.l.s4 1966171168
    %v109 = vunpack.c.0.s8 %v108
    %v110 = vlaneseq
    %v111 = vshrl.u32 %v110, 7
    %v112 = vsub.s32 %v109, %v111
    %v113 = vrot.slane %v105, %v112
    %v115 = vunpack.c.l.s4 1966171168
    %v116 = vunpack.c.0.s8 %v115
    %v117 = vlaneseq
    %v118 = vshrl.u32 %v117, 7
    %v119 = vsub.s32 %v116, %v118
    %v120 = vrot.slane %v106, %v119
    %v123 = vmul.f32 %v84, %v113
    %v124 = vmul.f32 %v86, %v120
    %v125 = vadd.f32 %v81, %v123
    %v126 = vadd.f32 %v82, %v124
    %s127 = scalar_lea.vmem [#allocation2], 2
    %v128 = vld [vmem:[%s127] ss:$4 sm:$0x3]
    %s129 = scalar_lea.vmem [#allocation2], 10
    %v130 = vld [vmem:[%s129] ss:$4 sm:$0x3]
    %s131 = scalar_lea.vmem [#allocation5], 2
    %v132 = vld [vmem:[%s131] ss:$4 sm:$0x3]
    %v134 = vlaneseq
    %v135 = vshrl.u32 %v134, 7
    %v136 = vsub.s32 0, %v135
    %v137 = vrot.slane %v132, %v136
    %v138 = vlaneseq
    %v139 = vshrl.u32 %v138, 7
    %v140 = vsub.s32 1, %v139
    %v141 = vrot.slane %v132, %v140
    %v142 = vcombine.low %v137, %v141
    %v144 = vunpack.c.l.s4 1966171168
    %v145 = vunpack.c.0.s8 %v144
    %v146 = vlaneseq
    %v147 = vshrl.u32 %v146, 7
    %v148 = vsub.s32 %v145, %v147
    %v149 = vrot.slane %v142, %v148
    %v150 = vcombine.high %v149, %v149
    %v152 = vunpack.c.l.s4 1966171168
    %v153 = vunpack.c.0.s8 %v152
    %v154 = vlaneseq
    %v155 = vshrl.u32 %v154, 7
    %v156 = vsub.s32 %v153, %v155
    %v157 = vrot.slane %v149, %v156
    %v159 = vunpack.c.l.s4 1966171168
    %v160 = vunpack.c.0.s8 %v159
    %v161 = vlaneseq
    %v162 = vshrl.u32 %v161, 7
    %v163 = vsub.s32 %v160, %v162
    %v164 = vrot.slane %v150, %v163
    %v167 = vmul.f32 %v128, %v157
    %v168 = vmul.f32 %v130, %v164
    %v169 = vadd.f32 %v125, %v167
    %v170 = vadd.f32 %v126, %v168
    %s171 = scalar_lea.vmem [#allocation2], 3
    %v172 = vld [vmem:[%s171] ss:$4 sm:$0x3]
    %s173 = scalar_lea.vmem [#allocation2], 11
    %v174 = vld [vmem:[%s173] ss:$4 sm:$0x3]
    %s175 = scalar_lea.vmem [#allocation5], 3
    %v176 = vld [vmem:[%s175] ss:$4 sm:$0x3]
    %v178 = vlaneseq
    %v179 = vshrl.u32 %v178, 7
    %v180 = vsub.s32 0, %v179
    %v181 = vrot.slane %v176, %v180
    %v182 = vlaneseq
    %v183 = vshrl.u32 %v182, 7
    %v184 = vsub.s32 1, %v183
    %v185 = vrot.slane %v176, %v184
    %v186 = vcombine.low %v181, %v185
    %v188 = vunpack.c.l.s4 1966171168
    %v189 = vunpack.c.0.s8 %v188
    %v190 = vlaneseq
    %v191 = vshrl.u32 %v190, 7
    %v192 = vsub.s32 %v189, %v191
    %v193 = vrot.slane %v186, %v192
    %v194 = vcombine.high %v193, %v193
    %v196 = vunpack.c.l.s4 1966171168
    %v197 = vunpack.c.0.s8 %v196
    %v198 = vlaneseq
    %v199 = vshrl.u32 %v198, 7
    %v200 = vsub.s32 %v197, %v199
    %v201 = vrot.slane %v193, %v200
    %v203 = vunpack.c.l.s4 1966171168
    %v204 = vunpack.c.0.s8 %v203
    %v205 = vlaneseq
    %v206 = vshrl.u32 %v205, 7
    %v207 = vsub.s32 %v204, %v206
    %v208 = vrot.slane %v194, %v207
    %v211 = vmul.f32 %v172, %v201
    %v212 = vmul.f32 %v174, %v208
    %v213 = vadd.f32 %v169, %v211
    %v214 = vadd.f32 %v170, %v212
    %v215 = vld [vmem:[%s2] sm:$0x3]
    %v217 = vlaneseq
    %v218 = vshrl.u32 %v217, 7
    %v219 = vsub.s32 0, %v218
    %v220 = vrot.slane %v215, %v219
    %v221 = vlaneseq
    %v222 = vshrl.u32 %v221, 7
    %v223 = vsub.s32 1, %v222
    %v224 = vrot.slane %v215, %v223
    %v225 = vcombine.low %v220, %v224
    %v227 = vunpack.c.l.s4 1966171168
    %v228 = vunpack.c.0.s8 %v227
    %v229 = vlaneseq
    %v230 = vshrl.u32 %v229, 7
    %v231 = vsub.s32 %v228, %v230
    %v232 = vrot.slane %v225, %v231
    %v233 = vcombine.high %v232, %v232
    %v235 = vunpack.c.l.s4 1966171168
    %v236 = vunpack.c.0.s8 %v235
    %v237 = vlaneseq
    %v238 = vshrl.u32 %v237, 7
    %v239 = vsub.s32 %v236, %v238
    %v240 = vrot.slane %v232, %v239
    %v242 = vunpack.c.l.s4 1966171168
    %v243 = vunpack.c.0.s8 %v242
    %v244 = vlaneseq
    %v245 = vshrl.u32 %v244, 7
    %v246 = vsub.s32 %v243, %v245
    %v247 = vrot.slane %v233, %v246
    %v250 = vadd.f32 %v213, %v240
    %v251 = vadd.f32 %v214, %v247
    %v254 = vcombine.low %v250, %v251
    %v256 = vunpack.c.l.s4 1935823168
    %v257 = vunpack.c.0.s8 %v256
    %v258 = vlaneseq
    %v259 = vshrl.u32 %v258, 7
    %v260 = vsub.s32 %v257, %v259
    %v261 = vrot.slane %v254, %v260
    %263 = vst [vmem:[#allocation7] sm:$0xf] %v261
    // Predicated region
    $region22: #{tpu_custom_call.1} parent=1 // pred_check
      _
    $region23: #{tpu_custom_call.1} parent=1 // pred_check_branch
      %265 = sbr.rel (0) target = $region25
    $region24: #{tpu_custom_call.1} parent=1 // pred_region
      %s267 = ssub.s32 64, 64
      %268 = vsyncadd [#allocation4], %s267
      %s270 = sshll.u32 [#allocation7], 4
      %s271 = int_to_ptr.vmem [resolvable:$true] %s270
      %273 = dma.vmem_to_hbm [thread:$0]  %s271, 64, %s3, [#allocation4]
    $region25: #{tpu_custom_call.1} parent=1 // pred_fallthru
      _
    // Predicated region
    $region26: #{tpu_custom_call.1} parent=1 // pred_check
      _
    $region27: #{tpu_custom_call.1} parent=1 // pred_check_branch
      %275 = sbr.rel (0) target = $region29
    $region28: #{tpu_custom_call.1} parent=1 // pred_region
      %276 = dma.done [#allocation4], 64
    $region29: #{tpu_custom_call.1} parent=1 // pred_fallthru
      _
    %277 = vsyncpa [#allocation3], 1
    %278 = vsyncpa [#allocation6], 1
    %279 = vsyncpa [#allocation4], 1

</llo_original>
